<compile_context>
chip_gen: v6e
topology: v6e:2x2x1
jax: 0.10.0
libtpu: 0.0.40
codegen_flags: <defaults>
</compile_context>

<pallas_src>
import jax
import jax.numpy as jnp
from jax.experimental import pallas as pl
from jax.experimental.pallas import tpu as pltpu


def _round_up(x: int, m: int) -> int:
    return ((x + m - 1) // m) * m


def _vmem_capacity_bytes() -> int:
    """Physical VMEM per core; conservative (v7x-sized) fallback if unknown."""
    try:
        cap = getattr(pltpu.get_tpu_info(), "vmem_capacity_bytes", None)
        if cap:
            return int(cap)
    except Exception:
        pass
    return 64 * 1024 * 1024


def _pick_tiles(batch: int, features_padded: int, vmem_limit_bytes: int):
    """Choose (TF, TB) for (TB, TF) input blocks.

    Budget one block at f32 width (covers bf16 upcast temporaries):
    2 inputs x 2 pipeline buffers x block + ~2 blocks of f32 temps ~= 6 blocks,
    so cap a single block at ~1/8 of the scoped-VMEM limit.
    """
    max_block_f32_bytes = max(vmem_limit_bytes // 8, 8 * 128 * 4)

    # Feature tile: largest multiple-of-128 divisor of Fp, capped so that
    #  (a) there are >= 4 feature steps when F allows it (>= 2 steps per
    #      TensorCore once v7x shards the "parallel" axis across its 2 TCs),
    #  (b) even an 8-sublane block stays within the budget.
    tf_cap = features_padded if features_padded < 512 else features_padded // 4
    tf_cap = min(tf_cap, max_block_f32_bytes // (8 * 4))
    tf_cap = max(128, (tf_cap // 128) * 128)
    tf = 128
    for cand in range(128, tf_cap + 1, 128):
        if features_padded % cand == 0:
            tf = cand

    # Batch tile: whole (8-padded) batch if it fits, otherwise tile the batch
    # and accumulate partial sums across the "arbitrary" grid axis.
    b_pad8 = _round_up(batch, 8)
    tb_cap = max(8, ((max_block_f32_bytes // (tf * 4)) // 8) * 8)
    tb = min(b_pad8, tb_cap)
    return tf, tb


def _make_range_loss_kernel(accumulate: bool):
    def kernel(pred_ref, target_ref, out_ref):
        pred = pred_ref[...].astype(jnp.float32)
        target = target_ref[...].astype(jnp.float32)
        diff = pred - target
        # Reduce over the batch (sublane) axis only; features stay lane-dense.
        partial = jnp.concatenate(
            [
                jnp.sum(diff * diff, axis=0, keepdims=True),   # sum of sq err
                jnp.sum(jnp.abs(diff), axis=0, keepdims=True), # sum of abs err
                jnp.sum(pred, axis=0, keepdims=True),          # sum of pred
                jnp.sum(pred * pred, axis=0, keepdims=True),   # sum of pred^2
            ],
            axis=0,
        )  # (4, TF)

        if accumulate:
            b_step = pl.program_id(1)

            @pl.when(b_step == 0)
            def _():
                out_ref[...] = partial

            @pl.when(b_step > 0)
            def _():
                out_ref[...] += partial
        else:
            out_ref[...] = partial

    return kernel


def range_loss(pred: jax.Array, target: jax.Array,
               alpha: float = 0.1, beta: float = 0.05) -> jax.Array:
    """RangeLoss(pred, target) via a feature/batch-tiled Pallas TPU kernel."""
    assert pred.shape == target.shape and pred.ndim == 2
    B, F = pred.shape

    vmem_cap = _vmem_capacity_bytes()
    vmem_limit = int(max(min(vmem_cap // 2, 64 * 1024 * 1024), 16 * 1024 * 1024))

    Fp = _round_up(F, 128)
    TF, TB = _pick_tiles(B, Fp, vmem_limit)
    Bp = _round_up(max(B, TB), TB)

    # Zero-pad to tile boundaries.  Padded rows/cols contribute exactly 0 to
    # every emitted sum; the epilogue divides by the ORIGINAL B and F.
    if (Bp, Fp) != (B, F):
        pad = ((0, Bp - B), (0, Fp - F))
        pred_p = jnp.pad(pred, pad)
        target_p = jnp.pad(target, pad)
    else:
        pred_p, target_p = pred, target

    n_f = Fp // TF
    n_b = Bp // TB

    grid_spec = pltpu.PrefetchScalarGridSpec(
        num_scalar_prefetch=0,
        grid=(n_f, n_b),  # reduction (batch) axis last
        in_specs=[
            pl.BlockSpec((TB, TF), lambda f, b: (b, f)),
            pl.BlockSpec((TB, TF), lambda f, b: (b, f)),
        ],
        # Single fused output: one (4, TF) block, resident across batch steps.
        out_specs=pl.BlockSpec((4, TF), lambda f, b: (0, f)),
    )

    stats = pl.pallas_call(
        _make_range_loss_kernel(accumulate=(n_b > 1)),
        out_shape=jax.ShapeDtypeStruct((4, Fp), jnp.float32),
        grid_spec=grid_spec,
        compiler_params=pltpu.CompilerParams(
            # Feature tiles are independent ("parallel": lets v7x shard them
            # across both TensorCores); batch tiles accumulate ("arbitrary").
            dimension_semantics=("parallel", "arbitrary"),
            vmem_limit_bytes=vmem_limit,
        ),
    )(pred_p, target_p)

    # Tiny epilogue in JAX: collapse lane-dense partials to the scalar loss.
    stats = stats[:, :F]
    sum_sq, sum_abs, sum_p, sum_p2 = stats[0], stats[1], stats[2], stats[3]

    n = B * F
    mse = jnp.sum(sum_sq) * (1.0 / n)
    l1 = jnp.sum(sum_abs) * (1.0 / n)
    # Unbiased (ddof=1) per-feature std from sufficient statistics.
    # B == 1 -> 0/0 -> NaN, matching torch.std's unbiased behavior.
    inv_bm1 = (1.0 / (B - 1)) if B > 1 else float("nan")
    var = (sum_p2 - sum_p * sum_p * (1.0 / B)) * inv_bm1
    std = jnp.sqrt(jnp.maximum(var, 0.0))
    std_mean = jnp.sum(std) * (1.0 / F)
    return mse + beta * l1 - alpha * std_mean


def _reference_range_loss(pred, target, alpha=0.1, beta=0.05):
    # Pure-JAX reference mirroring the PyTorch module exactly.
    mse = jnp.mean((pred - target) ** 2)
    l1 = beta * jnp.mean(jnp.abs(pred - target))
    rng = -alpha * jnp.mean(jnp.std(pred, axis=0, ddof=1))
    return mse + l1 + rng


if __name__ == "__main__":
    key = jax.random.PRNGKey(0)
    k1, k2, k3, k4 = jax.random.split(key, 4)

    # Case 1: small, lane-aligned shapes (multi-step pipelined feature grid).
    B, F = 16, 1024
    pred = jax.random.normal(k1, (B, F), dtype=jnp.float32)
    target = jax.random.normal(k2, (B, F), dtype=jnp.float32)
    loss = jax.block_until_ready(range_loss(pred, target, alpha=0.1, beta=0.05))
    ref = _reference_range_loss(pred, target, alpha=0.1, beta=0.05)
    assert jnp.allclose(loss, ref, atol=1e-5, rtol=1e-5), (loss, ref)

    # Case 2: unaligned B and F (exercises the zero-padding path).
    B2, F2 = 5, 200
    pred2 = jax.random.normal(k3, (B2, F2), dtype=jnp.float32)
    target2 = jax.random.normal(k4, (B2, F2), dtype=jnp.float32)
    loss2 = jax.block_until_ready(range_loss(pred2, target2, alpha=0.1, beta=0.05))
    ref2 = _reference_range_loss(pred2, target2, alpha=0.1, beta=0.05)
    assert jnp.allclose(loss2, ref2, atol=1e-5, rtol=1e-5), (loss2, ref2)

    print("KERNEL_OK")
</pallas_src>

<mosaic_0001>
module attributes {stable_mosaic.version = 11 : i64} {
  func.func @kernel(%arg0: i32, %arg1: i32, %arg2: memref<16x256xf32, #tpu.memory_space<vmem>>, %arg3: memref<16x256xf32, #tpu.memory_space<vmem>>, %arg4: memref<4x256xf32, #tpu.memory_space<vmem>>) attributes {dimension_semantics = [#tpu.dimension_semantics<parallel>, #tpu.dimension_semantics<arbitrary>], iteration_bounds = array<i64: 4, 1>, scalar_prefetch = 0 : i64, scratch_operands = 0 : i64, tpu.core_type = #tpu.core_type<tc>, window_params = [{transform_indices = @transform_0, window_bounds = array<i64: 16, 256>}, {transform_indices = @transform_1, window_bounds = array<i64: 16, 256>}, {transform_indices = @transform_2, window_bounds = array<i64: 4, 256>}]} {
    %c0 = arith.constant 0 : index
    %c0_0 = arith.constant 0 : index
    %0 = vector.load %arg2[%c0, %c0_0] : memref<16x256xf32, #tpu.memory_space<vmem>>, vector<16x256xf32>
    %c0_1 = arith.constant 0 : index
    %c0_2 = arith.constant 0 : index
    %1 = vector.load %arg3[%c0_1, %c0_2] : memref<16x256xf32, #tpu.memory_space<vmem>>, vector<16x256xf32>
    %2 = arith.subf %0, %1 : vector<16x256xf32>
    %3 = arith.mulf %2, %2 : vector<16x256xf32>
    %cst = arith.constant dense<0.000000e+00> : vector<256xf32>
    %4 = vector.multi_reduction <add>, %3, %cst [0] : vector<16x256xf32> to vector<256xf32>
    %5 = vector.shape_cast %4 : vector<256xf32> to vector<1x256xf32>
    %6 = math.absf %2 : vector<16x256xf32>
    %cst_3 = arith.constant dense<0.000000e+00> : vector<256xf32>
    %7 = vector.multi_reduction <add>, %6, %cst_3 [0] : vector<16x256xf32> to vector<256xf32>
    %8 = vector.shape_cast %7 : vector<256xf32> to vector<1x256xf32>
    %cst_4 = arith.constant dense<0.000000e+00> : vector<256xf32>
    %9 = vector.multi_reduction <add>, %0, %cst_4 [0] : vector<16x256xf32> to vector<256xf32>
    %10 = vector.shape_cast %9 : vector<256xf32> to vector<1x256xf32>
    %11 = arith.mulf %0, %0 : vector<16x256xf32>
    %cst_5 = arith.constant dense<0.000000e+00> : vector<256xf32>
    %12 = vector.multi_reduction <add>, %11, %cst_5 [0] : vector<16x256xf32> to vector<256xf32>
    %13 = vector.shape_cast %12 : vector<256xf32> to vector<1x256xf32>
    %14 = tpu.concatenate %5, %8, %10, %13 in 0 : vector<1x256xf32>, vector<1x256xf32>, vector<1x256xf32>, vector<1x256xf32> -> vector<4x256xf32>
    %c0_6 = arith.constant 0 : index
    %c0_7 = arith.constant 0 : index
    %15 = vector.load %arg4[%c0_6, %c0_7] : memref<4x256xf32, #tpu.memory_space<vmem>>, vector<4x256xf32>
    tpu.vector_store %arg4[%c0_6, %c0_7], %14 {strides = array<i32>} : memref<4x256xf32, #tpu.memory_space<vmem>>, vector<4x256xf32>,
    return
  }
  func.func @transform_0(%arg0: i32, %arg1: i32) -> (i32, i32) {
    %c0_i32 = arith.constant 0 : i32
    return %arg1, %arg0 : i32, i32
  }
  func.func @transform_1(%arg0: i32, %arg1: i32) -> (i32, i32) {
    %c0_i32 = arith.constant 0 : i32
    return %arg1, %arg0 : i32, i32
  }
  func.func @transform_2(%arg0: i32, %arg1: i32) -> (i32, i32) {
    %c0_i32 = arith.constant 0 : i32
    %c0_i32_0 = arith.constant 0 : i32
    return %c0_i32, %arg0 : i32, i32
  }
}

</mosaic_0001>

<llo_original>
// kernel: tpu_custom_call.1
$region0: #{tpu_custom_call.1}
  #allocation0 [shape = 'u32[]', space=smem, size = 0x4, offset = 0x4, fixed_abs, tag = 'smem constant byte address 0x4 - core index']
  #allocation1 [shape = 'u32[144,128]{1,0:T(1,128)}', space=vmem, size = 0x12000, scoped, tag = 'internal scratch']
  %s0 = inlined_call_operand.hbm [shape: f32[16,1024], index: 0, kind: input, shape index: {}]
  %s1 = inlined_call_operand.hbm [shape: f32[16,1024], index: 1, kind: input, shape index: {}]
  %s2 = inlined_call_operand.hbm [shape: f32[4,1024], index: 2, kind: output, shape index: {}]
  %s3 = sld [smem:[#allocation0]]
  $region49: #{tpu_custom_call.1} parent=0
    _
  %s5 = ssub.s32 1, %s3
  %s6 = scalar_select 0, %s5, %s3
  $region1: #{tpu_custom_call.1} parent=0
    #allocation2 [shape = 'u8[32768]{0}', space=vmem, size = 0x8000, scoped, tag = 'input window, operand 0']
    #allocation3 [shape = 's32[2]{0}', space=sflag, size = 0x8, scoped, tag = 'scoped memory for tpu_custom_call.1']
    #allocation4 [shape = 's32[2]{0}', space=sflag, size = 0x8, scoped, tag = 'scoped memory for tpu_custom_call.1']
    #allocation5 [shape = 'u8[32768]{0}', space=vmem, size = 0x8000, scoped, tag = 'input window, operand 1']
    #allocation6 [shape = 's32[2]{0}', space=sflag, size = 0x8, scoped, tag = 'scoped memory for tpu_custom_call.1']
    #allocation7 [shape = 'u8[8192]{0}', space=vmem, size = 0x2000, scoped, tag = 'output window, operand 0']
    %7 = vsyncpa [#allocation3], 0
    %s8 = scalar_lea.sflag [#allocation3], 1
    %9 = vsyncpa %s8, 0
    %10 = vsyncpa [#allocation6], 0
    %s11 = scalar_lea.sflag [#allocation6], 1
    %12 = vsyncpa %s11, 0
    %13 = vsyncpa [#allocation4], 0
    %s14 = scalar_lea.sflag [#allocation4], 1
    %15 = vsyncpa %s14, 0
    loop: start=0, step=1, limit=6
    $region2: #{tpu_custom_call.1} parent=1 // loop_pre_header
      _
    $region3: #{tpu_custom_call.1} parent=1 // loop_header
      %s17 = sphi 0, %s21
      %p18 = scmp.ge.s32.totalorder %s17, 6
      %s24 = sphi 0, %s36
      %s25 = sphi 0, %s32
      %s26 = sphi 0, %s24
      %s27 = sphi 0, %s25
      %s28 = sphi 0, %s26
      %s29 = sphi 0, %s27
      %s41 = sphi 0, %s43
      %s44 = sphi 0, %s41
      %s45 = sphi 0, %s44
      %s61 = sphi 0, %s45
      %s69 = sphi 0, %s71
      %s72 = sphi 0, %s69
      %s73 = sphi 0, %s72
      %s89 = sphi 0, %s73
      %s95 = sphi 0, %s97
      %s98 = sphi 0, %s95
      %s99 = sphi 0, %s98
      %s115 = sphi 0, %s99
    $region4: #{tpu_custom_call.1} parent=1 // loop_header_branch
      %20 = sbr.rel (%p18) target = $region8
    $region5: #{tpu_custom_call.1} parent=1 // loop_body
      %s22 = ssub.s32 %s17, 1
      %s23 = ssub.s32 %s17, 2
      %s30 = sadd.s32 1, %s25
      %p31 = scmp.ge.s32.totalorder %s30, 1
      %s32 = scalar_select %p31, 0, %s30
      %s33 = sadd.s32 1, %s24
      %s34 = scalar_select %p31, %s33, %s24
      %p35 = scmp.ge.s32.totalorder %s34, 4
      %s36 = scalar_select %p35, 0, %s34
      %s37 = ssub.s32 %s25, %s32
      %s38 = ssub.s32 %s24, %s36
      %s39 = sor.u32 %s37, %s38
      %p40 = scmp.eq.s32.totalorder %s39, 0
      %s42 = sadd.s32 %s41, 1
      %s43 = scalar_select %p40, %s41, %s42
      %p46 = pneg %p40
      %p47 = scmp.eq.s32.totalorder %s17, 3
      %p48 = por %p46, %p47
      %p49 = scmp.ne.s32.totalorder %s41, %s44
      %p50 = scmp.eq.s32.totalorder %s17, 0
      %p51 = por %p49, %p50
      %p52 = scmp.ne.s32.totalorder %s41, %s44
      %p53 = scmp.eq.s32.totalorder %s22, 3
      %p54 = por %p52, %p53
      %p55 = scmp.ne.s32.totalorder %s44, %s45
      %p56 = scmp.eq.s32.totalorder %s22, 0
      %p57 = por %p55, %p56
      %p58 = scmp.ne.s32.totalorder %s44, %s45
      %p59 = scmp.eq.s32.totalorder %s23, 3
      %p60 = por %p58, %p59
      %p62 = scmp.ne.s32.totalorder %s45, %s61
      %p63 = scmp.eq.s32.totalorder %s23, 0
      %p64 = por %p62, %p63
      %s65 = ssub.s32 %s25, %s32
      %s66 = ssub.s32 %s24, %s36
      %s67 = sor.u32 %s65, %s66
      %p68 = scmp.eq.s32.totalorder %s67, 0
      %s70 = sadd.s32 %s69, 1
      %s71 = scalar_select %p68, %s69, %s70
      %p74 = pneg %p68
      %p75 = scmp.eq.s32.totalorder %s17, 3
      %p76 = por %p74, %p75
      %p77 = scmp.ne.s32.totalorder %s69, %s72
      %p78 = scmp.eq.s32.totalorder %s17, 0
      %p79 = por %p77, %p78
      %p80 = scmp.ne.s32.totalorder %s69, %s72
      %p81 = scmp.eq.s32.totalorder %s22, 3
      %p82 = por %p80, %p81
      %p83 = scmp.ne.s32.totalorder %s72, %s73
      %p84 = scmp.eq.s32.totalorder %s22, 0
      %p85 = por %p83, %p84
      %p86 = scmp.ne.s32.totalorder %s72, %s73
      %p87 = scmp.eq.s32.totalorder %s23, 3
      %p88 = por %p86, %p87
      %p90 = scmp.ne.s32.totalorder %s73, %s89
      %p91 = scmp.eq.s32.totalorder %s23, 0
      %p92 = por %p90, %p91
      %s93 = ssub.s32 %s24, %s36
      %p94 = scmp.eq.s32.totalorder %s93, 0
      %s96 = sadd.s32 %s95, 1
      %s97 = scalar_select %p94, %s95, %s96
      %p100 = pneg %p94
      %p101 = scmp.eq.s32.totalorder %s17, 3
      %p102 = por %p100, %p101
      %p103 = scmp.ne.s32.totalorder %s95, %s98
      %p104 = scmp.eq.s32.totalorder %s17, 0
      %p105 = por %p103, %p104
      %p106 = scmp.ne.s32.totalorder %s95, %s98
      %p107 = scmp.eq.s32.totalorder %s22, 3
      %p108 = por %p106, %p107
      %p109 = scmp.ne.s32.totalorder %s98, %s99
      %p110 = scmp.eq.s32.totalorder %s22, 0
      %p111 = por %p109, %p110
      %p112 = scmp.ne.s32.totalorder %s98, %s99
      %p113 = scmp.eq.s32.totalorder %s23, 3
      %p114 = por %p112, %p113
      %p116 = scmp.ne.s32.totalorder %s99, %s115
      %p117 = scmp.eq.s32.totalorder %s23, 0
      %p118 = por %p116, %p117
      %p119 = scmp.le.s32.totalorder 1, %s17
      %p120 = scmp.lt.s32.totalorder %s17, 5
      %p121 = pnand %p119, %p120
      %p122 = pneg %p121
      // Predicated region
      $region9: #{tpu_custom_call.1} parent=5 // pred_check
        _
      $region10: #{tpu_custom_call.1} parent=5 // pred_check_branch
        %124 = sbr.rel (%p121) target = $region12
      $region11: #{tpu_custom_call.1} parent=5 // pred_region
        %s125 = ssub.s32 %s17, 1
      $region12: #{tpu_custom_call.1} parent=5 // pred_fallthru
        _
      %p126 = scmp.lt.s32.totalorder %s17, 4
      // Predicated region
      $region13: #{tpu_custom_call.1} parent=5 // pred_check
        %p127 = pneg %p126
      $region14: #{tpu_custom_call.1} parent=5 // pred_check_branch
        %129 = sbr.rel (%p127) target = $region16
      $region15: #{tpu_custom_call.1} parent=5 // pred_region
        // Predicated region
        $region17: #{tpu_custom_call.1} parent=15 // pred_check
          %p130 = pneg %p51
        $region18: #{tpu_custom_call.1} parent=15 // pred_check_branch
          %132 = sbr.rel (%p130) target = $region20
        $region19: #{tpu_custom_call.1} parent=15 // pred_region
          %s133 = sand.u32 %s41, 1
          %s134 = scalar_lea.sflag [#allocation3], %s133
          %s135 = sand.u32 %s41, 1
          %s136 = smul.addr %s135, 32
          %s137 = scalar_lea.vmem [#allocation2], %s136
          %s138 = smul.u32 2, %s25
          %s139 = smul.u32 2, %s24
          %s141 = ssub.s32 512, 512
          %142 = vsyncadd %s134, %s141
          %s143 = smul.addr %s138, 8
          %s144 = sadd.s32 %s139, %s143
          %s145 = smul.addr %s144, 128
          %s146 = scalar_lea.hbm %s0, %s145
          %s147 = sshll.u32 %s137, 4
          %s148 = int_to_ptr.vmem [resolvable:$true] %s147
          %153 = dma.hbm_to_vmem [thread:$0]  %s146, 512, %s148, %s134, 1024, 256, 16
        $region20: #{tpu_custom_call.1} parent=15 // pred_fallthru
          _
        // Predicated region
        $region21: #{tpu_custom_call.1} parent=15 // pred_check
          %p154 = pneg %p79
        $region22: #{tpu_custom_call.1} parent=15 // pred_check_branch
          %156 = sbr.rel (%p154) target = $region24
        $region23: #{tpu_custom_call.1} parent=15 // pred_region
          %s157 = sand.u32 %s69, 1
          %s158 = scalar_lea.sflag [#allocation6], %s157
          %s159 = sand.u32 %s69, 1
          %s160 = smul.addr %s159, 32
          %s161 = scalar_lea.vmem [#allocation5], %s160
          %s162 = smul.u32 2, %s25
          %s163 = smul.u32 2, %s24
          %s165 = ssub.s32 512, 512
          %166 = vsyncadd %s158, %s165
          %s167 = smul.addr %s162, 8
          %s168 = sadd.s32 %s163, %s167
          %s169 = smul.addr %s168, 128
          %s170 = scalar_lea.hbm %s1, %s169
          %s171 = sshll.u32 %s161, 4
          %s172 = int_to_ptr.vmem [resolvable:$true] %s171
          %177 = dma.hbm_to_vmem [thread:$0]  %s170, 512, %s172, %s158, 1024, 256, 16
        $region24: #{tpu_custom_call.1} parent=15 // pred_fallthru
          _
      $region16: #{tpu_custom_call.1} parent=5 // pred_fallthru
        _
      %p178 = scmp.le.s32.totalorder 1, %s17
      %p179 = scmp.lt.s32.totalorder %s17, 5
      %p180 = pnand %p178, %p179
      %p181 = pneg %p180
      // Predicated region
      $region25: #{tpu_custom_call.1} parent=5 // pred_check
        _
      $region26: #{tpu_custom_call.1} parent=5 // pred_check_branch
        %183 = sbr.rel (%p180) target = $region28
      $region27: #{tpu_custom_call.1} parent=5 // pred_region
        %s184 = ssub.s32 %s17, 1
        %s185 = sand.u32 %s44, 1
        %s186 = scalar_lea.sflag [#allocation3], %s185
        %s187 = sand.u32 %s44, 1
        %s188 = smul.addr %s187, 32
        %s189 = scalar_lea.vmem [#allocation2], %s188
        // Predicated region
        $region29: #{tpu_custom_call.1} parent=27 // pred_check
          %p190 = pneg %p57
        $region30: #{tpu_custom_call.1} parent=27 // pred_check_branch
          %192 = sbr.rel (%p190) target = $region32
        $region31: #{tpu_custom_call.1} parent=27 // pred_region
          %193 = dma.done %s186, 512
        $region32: #{tpu_custom_call.1} parent=27 // pred_fallthru
          _
        %s194 = sand.u32 %s72, 1
        %s195 = scalar_lea.sflag [#allocation6], %s194
        %s196 = sand.u32 %s72, 1
        %s197 = smul.addr %s196, 32
        %s198 = scalar_lea.vmem [#allocation5], %s197
        // Predicated region
        $region33: #{tpu_custom_call.1} parent=27 // pred_check
          %p199 = pneg %p85
        $region34: #{tpu_custom_call.1} parent=27 // pred_check_branch
          %201 = sbr.rel (%p199) target = $region36
        $region35: #{tpu_custom_call.1} parent=27 // pred_region
          %202 = dma.done %s195, 512
        $region36: #{tpu_custom_call.1} parent=27 // pred_fallthru
          _
        %s203 = sand.u32 %s44, 1
        %s204 = scalar_lea.sflag [#allocation3], %s203
        %s205 = sand.u32 %s44, 1
        %s206 = smul.addr %s205, 32
        %s207 = scalar_lea.vmem [#allocation2], %s206
        %p208 = pneg %p57
        %p209 = pneg %p54
        %s210 = sand.u32 %s72, 1
        %s211 = scalar_lea.sflag [#allocation6], %s210
        %s212 = sand.u32 %s72, 1
        %s213 = smul.addr %s212, 32
        %s214 = scalar_lea.vmem [#allocation5], %s213
        %p215 = pneg %p85
        %p216 = pneg %p82
        %p217 = pneg %p111
        %p218 = pneg %p108
        %s219 = sand.u32 %s98, 1
        %s220 = scalar_lea.sflag [#allocation4], %s219
        %s221 = sand.u32 %s98, 1
        %s222 = smul.addr %s221, 8
        %s223 = scalar_lea.vmem [#allocation7], %s222
        %s224 = smul.u32 2, %s27
        %s225 = smul.u32 2, %s26
        %s226 = smul.u32 2, %s27
        %s227 = smul.u32 2, %s26
        %s228 = smul.u32 2, %s26
        %v229 = vld [vmem:[%s189] sm:$0xff]
        %v230 = vld [vmem:[%s189 + $0x8] sm:$0xff]
        %v231 = vld [vmem:[%s189 + $0x10] sm:$0xff]
        %v232 = vld [vmem:[%s189 + $0x18] sm:$0xff]
        %v233 = vld [vmem:[%s198] sm:$0xff]
        %v234 = vld [vmem:[%s198 + $0x8] sm:$0xff]
        %v235 = vld [vmem:[%s198 + $0x10] sm:$0xff]
        %v236 = vld [vmem:[%s198 + $0x18] sm:$0xff]
        %v237 = vsub.f32 %v229, %v233
        %v238 = vsub.f32 %v230, %v234
        %v239 = vsub.f32 %v231, %v235
        %v240 = vsub.f32 %v232, %v236
        %v241 = vmul.f32 %v237, %v237
        %v242 = vmul.f32 %v238, %v238
        %v243 = vmul.f32 %v239, %v239
        %v244 = vmul.f32 %v240, %v240
        %v245 = vadd.f32 %v241, %v243
        %v246 = vrot.slane %v245, 4
        %v247 = vadd.f32 %v245, %v246
        %v248 = vrot.slane %v247, 2
        %v249 = vadd.f32 %v247, %v248
        %v250 = vrot.slane %v249, 1
        %v251 = vadd.f32 %v249, %v250
        %v252 = vadd.f32 %v242, %v244
        %v253 = vrot.slane %v252, 4
        %v254 = vadd.f32 %v252, %v253
        %v255 = vrot.slane %v254, 2
        %v256 = vadd.f32 %v254, %v255
        %v257 = vrot.slane %v256, 1
        %v258 = vadd.f32 %v256, %v257
        %v259 = vand.u32 2147483647, %v237
        %v260 = vand.u32 2147483647, %v238
        %v261 = vand.u32 2147483647, %v239
        %v262 = vand.u32 2147483647, %v240
        %v263 = vadd.f32 %v259, %v261
        %v264 = vrot.slane %v263, 4
        %v265 = vadd.f32 %v263, %v264
        %v266 = vrot.slane %v265, 2
        %v267 = vadd.f32 %v265, %v266
        %v268 = vrot.slane %v267, 1
        %v269 = vadd.f32 %v267, %v268
        %v270 = vadd.f32 %v260, %v262
        %v271 = vrot.slane %v270, 4
        %v272 = vadd.f32 %v270, %v271
        %v273 = vrot.slane %v272, 2
        %v274 = vadd.f32 %v272, %v273
        %v275 = vrot.slane %v274, 1
        %v276 = vadd.f32 %v274, %v275
        %v277 = vadd.f32 %v229, %v231
        %v278 = vrot.slane %v277, 4
        %v279 = vadd.f32 %v277, %v278
        %v280 = vrot.slane %v279, 2
        %v281 = vadd.f32 %v279, %v280
        %v282 = vrot.slane %v281, 1
        %v283 = vadd.f32 %v281, %v282
        %v284 = vadd.f32 %v230, %v232
        %v285 = vrot.slane %v284, 4
        %v286 = vadd.f32 %v284, %v285
        %v287 = vrot.slane %v286, 2
        %v288 = vadd.f32 %v286, %v287
        %v289 = vrot.slane %v288, 1
        %v290 = vadd.f32 %v288, %v289
        %v291 = vmul.f32 %v229, %v229
        %v292 = vmul.f32 %v230, %v230
        %v293 = vmul.f32 %v231, %v231
        %v294 = vmul.f32 %v232, %v232
        %v295 = vadd.f32 %v291, %v293
        %v296 = vrot.slane %v295, 4
        %v297 = vadd.f32 %v295, %v296
        %v298 = vrot.slane %v297, 2
        %v299 = vadd.f32 %v297, %v298
        %v300 = vrot.slane %v299, 1
        %v301 = vadd.f32 %v299, %v300
        %v302 = vadd.f32 %v292, %v294
        %v303 = vrot.slane %v302, 4
        %v304 = vadd.f32 %v302, %v303
        %v305 = vrot.slane %v304, 2
        %v306 = vadd.f32 %v304, %v305
        %v307 = vrot.slane %v306, 1
        %v308 = vadd.f32 %v306, %v307
        %vm309 = vcmask 1040384
        %v310 = vsel %vm309, %v251, %v269
        %v311 = vsel %vm309, %v258, %v276
        %vm312 = vcmask 1041408
        %v313 = vsel %vm312, %v310, %v283
        %v314 = vsel %vm312, %v311, %v290
        %vm315 = vcmask 1042432
        %v316 = vsel %vm315, %v313, %v301
        %v317 = vsel %vm315, %v314, %v308
        %v320 = vcombine.low %v316, %v317
        %322 = vst [vmem:[%s223] sm:$0xff] %v320
        %s323 = sand.u32 %s98, 1
        %s324 = scalar_lea.sflag [#allocation4], %s323
        %s325 = sand.u32 %s98, 1
        %s326 = smul.addr %s325, 8
        %s327 = scalar_lea.vmem [#allocation7], %s326
        // Predicated region
        $region37: #{tpu_custom_call.1} parent=27 // pred_check
          %p328 = pneg %p108
        $region38: #{tpu_custom_call.1} parent=27 // pred_check_branch
          %330 = sbr.rel (%p328) target = $region40
        $region39: #{tpu_custom_call.1} parent=27 // pred_region
          %s331 = smul.u32 2, %s26
          %s333 = ssub.s32 128, 128
          %334 = vsyncadd %s324, %s333
          %s335 = smul.addr %s331, 64
          %s336 = scalar_lea.hbm %s2, %s335
          %s338 = sshll.u32 %s327, 4
          %s339 = int_to_ptr.vmem [resolvable:$true] %s338
          %341 = dma.vmem_to_hbm [thread:$0]  %s339, 128, %s336, %s324
        $region40: #{tpu_custom_call.1} parent=27 // pred_fallthru
          _
      $region28: #{tpu_custom_call.1} parent=5 // pred_fallthru
        _
      %p342 = scmp.le.s32.totalorder 2, %s17
      // Predicated region
      $region41: #{tpu_custom_call.1} parent=5 // pred_check
        %p343 = pneg %p342
      $region42: #{tpu_custom_call.1} parent=5 // pred_check_branch
        %345 = sbr.rel (%p343) target = $region44
      $region43: #{tpu_custom_call.1} parent=5 // pred_region
        %s346 = ssub.s32 %s17, 2
        // Predicated region
        $region45: #{tpu_custom_call.1} parent=43 // pred_check
          %p347 = pneg %p114
        $region46: #{tpu_custom_call.1} parent=43 // pred_check_branch
          %349 = sbr.rel (%p347) target = $region48
        $region47: #{tpu_custom_call.1} parent=43 // pred_region
          %s350 = sand.u32 %s99, 1
          %s351 = scalar_lea.sflag [#allocation4], %s350
          %s352 = sand.u32 %s99, 1
          %s353 = smul.addr %s352, 8
          %s354 = scalar_lea.vmem [#allocation7], %s353
          %355 = dma.done %s351, 128
        $region48: #{tpu_custom_call.1} parent=43 // pred_fallthru
          _
      $region44: #{tpu_custom_call.1} parent=5 // pred_fallthru
        _
    $region6: #{tpu_custom_call.1} parent=1 // loop_footer
      %s21 = sadd.s32 1, %s17
    $region7: #{tpu_custom_call.1} parent=1 // loop_footer_branch
      %16 = sbr.rel target = $region3
    $region8: #{tpu_custom_call.1} parent=1 // loop_exit
      _
    %356 = vsyncpa [#allocation3], 1
    %s357 = scalar_lea.sflag [#allocation3], 1
    %358 = vsyncpa %s357, 1
    %359 = vsyncpa [#allocation6], 1
    %s360 = scalar_lea.sflag [#allocation6], 1
    %361 = vsyncpa %s360, 1
    %362 = vsyncpa [#allocation4], 1
    %s363 = scalar_lea.sflag [#allocation4], 1
    %364 = vsyncpa %s363, 1

</llo_original>
